<compile_context>
chip_gen: v7x
topology: tpu7x:2x2x1
jax: 0.10.0
libtpu: 0.0.40
codegen_flags: <defaults>
</compile_context>

<pallas_src>
import functools

import jax
import jax.numpy as jnp
from jax.experimental import pallas as pl
from jax.experimental.pallas import tpu as pltpu


def attention_kernel(x_ref, w1_ref, b1_ref, w2_ref, o_ref, *, valid_s):
    # x_ref: (Bt, S, D) block; Bt batch rows per grid step so the score MLP is
    # one (Bt*S, D) x (D, H) MXU matmul instead of per-batch slivers.
    Bt, S, D = x_ref.shape
    H = w1_ref.shape[1]

    # ---- score MLP: one MXU matmul over all Bt*S positions ----------------
    # (leading-dim merge only; S is padded to the sublane multiple in the
    # wrapper so this reshape is layout-preserving — no per-step relayout.)
    x2d = x_ref[...].reshape(Bt * S, D)
    h = jnp.tanh(
        jnp.dot(x2d, w1_ref[...], preferred_element_type=jnp.float32)
        + b1_ref[...]                                    # (1, H) broadcast
    )                                                    # (Bt*S, H) f32

    # ---- per-position scalar score, sequence kept on the LANE axis ---------
    h3 = h.reshape(Bt, S, H)
    scores = jnp.sum(h3 * w2_ref[...], axis=-1)          # (Bt, S) f32

    if valid_s != S:
        # Mask padded sequence positions so they get zero softmax weight.
        lane = jax.lax.broadcasted_iota(jnp.int32, (Bt, S), 1)
        scores = jnp.where(lane < valid_s, scores, -jnp.inf)

    # ---- softmax over the sequence axis (PyTorch dim=1): lane reductions ---
    m = jnp.max(scores, axis=-1, keepdims=True)          # (Bt, 1)
    e = jnp.exp(scores - m)                              # (Bt, S)
    denom = jnp.sum(e, axis=-1, keepdims=True)           # (Bt, 1)
    weights = e / denom                                  # exact; denom is tiny

    # ---- weighted sum over seq on the VPU/XLU -------------------------------
    # Re-read x from VMEM here (instead of holding the top-of-kernel load live
    # across the softmax) so vreg live ranges stay short at MiB-scale blocks.
    # All elementwise math stays f32 (v5e VPU/EUP have no bf16).
    x = x_ref[...].astype(jnp.float32)                    # (Bt, S, D)
    attended = jnp.sum(weights[:, :, None] * x, axis=1)   # (Bt, D) f32

    # NOTE: the (Bt, D) out block spans the full feature dim, so its HBM
    # writeback DMA is fully contiguous even though D < 128; the masked vst
    # into the VMEM out block is not on the HBM-BW critical path, so we skip
    # the lane-dense (B*D//128, 128) re-flattening to avoid an in-kernel
    # cross-lane relayout of `attended`.
    o_ref[...] = attended.astype(o_ref.dtype)


def _pick_batch_tile(B, S, D, itemsize):
    """Pick Bt so (a) the x block is ~2 MiB (HBM-BW-bound kernel: big DMAs
    amortize the ~0.35 us per-step overhead), (b) the grid stays even and
    ideally >=4 steps so v7x's two TensorCores are both fed, and (c) the
    output block (Bt, D) satisfies the (8, 128) tiling rule
    (Bt % 8 == 0 or Bt == B)."""
    row_bytes = S * D * itemsize
    target_bytes = 2 << 20     # ~2 MiB block -> 85%+ of HBM roofline territory
    max_bytes = 4 << 20        # keep 2x double-buffered x well under scoped VMEM

    candidates = [bt for bt in range(1, B + 1)
                  if B % bt == 0 and (bt % 8 == 0 or bt == B)]

    def score(bt):
        blk = bt * row_bytes
        steps = B // bt
        s = min(blk, target_bytes) / target_bytes
        if blk > max_bytes:
            s -= (blk - max_bytes) / max_bytes
        if steps % 2 == 0:
            s += 0.25
        if steps >= 4:
            s += 0.25
        return s

    return max(candidates, key=score)


def attention_forward(x, w1, b1, w2, b2=None, *, batch_tile=None):
    """Pallas forward for the PyTorch `Attention` module.

    x: (B, S, D); w1: (D, H); b1: (H,); w2: (H, 1); b2: (1,). Returns (B, D).

    b2 is accepted for interface parity but unused: adding the same scalar to
    every position's score cannot change a softmax over the sequence.

    To halve HBM traffic on v6e/v7x, pass x already in bf16 from the producer;
    this wrapper never casts (a wrapper-side cast is a separate extra HBM pass
    and a net loss for a bandwidth-bound kernel).
    """
    del b2  # dead input: softmax shift invariance
    B, S, D = x.shape
    H = w1.shape[1]
    out_dtype = x.dtype
    itemsize = jnp.dtype(x.dtype).itemsize

    # Pad S to the sublane multiple for this dtype so the in-kernel reshapes
    # (Bt, S, D) <-> (Bt*S, D) stay layout-preserving.
    sub = 32 // itemsize          # 8 for f32, 16 for bf16
    S_pad = ((S + sub - 1) // sub) * sub
    if S_pad != S:
        x = jnp.pad(x, ((0, 0), (0, S_pad - S), (0, 0)))

    if batch_tile is None:
        batch_tile = _pick_batch_tile(B, S_pad, D, itemsize)
    Bt = batch_tile
    assert B % Bt == 0, "batch_tile must divide batch"
    assert Bt % 8 == 0 or Bt == B, "batch_tile must be a multiple of 8 or == B"

    w1 = w1.astype(x.dtype)                        # tiny; keeps the dot single-dtype
    b1_2d = b1.reshape(1, H).astype(jnp.float32)
    w2_2d = w2.reshape(1, H).astype(jnp.float32)   # (H, 1) used as a row broadcast

    # TODO(synk): if a single (8, S_pad, D) block ever exceeds the scoped VMEM
    # budget (huge S*D), tile the sequence axis too and switch the softmax to
    # an online (pl.when init/finalize) formulation.
    kernel = functools.partial(attention_kernel, valid_s=S)

    return pl.pallas_call(
        kernel,
        out_shape=jax.ShapeDtypeStruct((B, D), out_dtype),
        grid_spec=pltpu.PrefetchScalarGridSpec(
            num_scalar_prefetch=0,
            grid=(B // Bt,),
            in_specs=[
                pl.BlockSpec((Bt, S_pad, D), lambda b: (b, 0, 0)),
                pl.BlockSpec((D, H), lambda b: (0, 0)),
                pl.BlockSpec((1, H), lambda b: (0, 0)),
                pl.BlockSpec((1, H), lambda b: (0, 0)),
            ],
            out_specs=pl.BlockSpec((Bt, D), lambda b: (b, 0)),
        ),
        compiler_params=pltpu.CompilerParams(
            dimension_semantics=("parallel",),
            # 2 x (<=4 MiB) double-buffered x + weights + out fits comfortably;
            # explicit limit keeps v5e (16 MiB scoped default) and v7x
            # (64 MiB physical VMEM) happy with the larger blocks.
            vmem_limit_bytes=32 << 20,
        ),
    )(x, w1, b1_2d, w2_2d)


def attention_reference(x, w1, b1, w2, b2):
    h = jnp.tanh(jnp.einsum("bsd,dh->bsh", x, w1) + b1)
    scores = jnp.einsum("bsh,h->bs", h, w2.reshape(-1)) + b2[0]
    weights = jax.nn.softmax(scores, axis=1)[..., None]   # softmax over seq
    return jnp.sum(weights * x, axis=1)


if __name__ == "__main__":
    def run_case(B, S, D, H, key):
        kx, kw1, kb1, kw2, kb2 = jax.random.split(key, 5)
        x = jax.random.normal(kx, (B, S, D), dtype=jnp.float32)
        w1 = jax.random.uniform(kw1, (D, H), minval=-0.1, maxval=0.1, dtype=jnp.float32)
        b1 = jax.random.uniform(kb1, (H,), minval=-0.1, maxval=0.1, dtype=jnp.float32)
        w2 = jax.random.uniform(kw2, (H, 1), minval=-0.1, maxval=0.1, dtype=jnp.float32)
        b2 = jax.random.uniform(kb2, (1,), minval=-0.1, maxval=0.1, dtype=jnp.float32)

        out = jax.block_until_ready(attention_forward(x, w1, b1, w2, b2))
        ref = attention_reference(x, w1, b1, w2, b2)
        assert out.shape == (B, D)
        assert jnp.allclose(out, ref, atol=1e-4, rtol=1e-4), f"mismatch vs reference (B={B})"

    key = jax.random.PRNGKey(0)
    k_small, k_large = jax.random.split(key)

    # Small shapes implied by the PyTorch module: batch=2, seq=8, input_dim=32, hidden=16.
    run_case(2, 8, 32, 16, k_small)
    # Moderately larger batch: exercises the DMA-sized tiling (Bt=128, 4-step
    # "parallel" grid) and the non-trivial out BlockSpec path.
    run_case(512, 8, 32, 16, k_large)

    print("KERNEL_OK")
</pallas_src>

<mosaic_0001>
module attributes {stable_mosaic.version = 11 : i64} {
  func.func @attention_kernel(%arg0: i32, %arg1: memref<2x8x32xf32, #tpu.memory_space<vmem>>, %arg2: memref<32x16xf32, #tpu.memory_space<vmem>>, %arg3: memref<1x16xf32, #tpu.memory_space<vmem>>, %arg4: memref<1x16xf32, #tpu.memory_space<vmem>>, %arg5: memref<2x32xf32, #tpu.memory_space<vmem>>) attributes {dimension_semantics = [#tpu.dimension_semantics<parallel>], iteration_bounds = array<i64: 1>, scalar_prefetch = 0 : i64, scratch_operands = 0 : i64, tpu.core_type = #tpu.core_type<tc>, window_params = [{transform_indices = @transform_0, window_bounds = array<i64: 2, 8, 32>}, {pipeline_mode = #tpu.pipeline_mode<synchronous>, transform_indices = @transform_1, window_bounds = array<i64: 32, 16>}, {pipeline_mode = #tpu.pipeline_mode<synchronous>, transform_indices = @transform_2, window_bounds = array<i64: 1, 16>}, {pipeline_mode = #tpu.pipeline_mode<synchronous>, transform_indices = @transform_3, window_bounds = array<i64: 1, 16>}, {transform_indices = @transform_4, window_bounds = array<i64: 2, 32>}]} {
    %c0 = arith.constant 0 : index
    %c0_0 = arith.constant 0 : index
    %c0_1 = arith.constant 0 : index
    %0 = vector.load %arg1[%c0, %c0_0, %c0_1] : memref<2x8x32xf32, #tpu.memory_space<vmem>>, vector<2x8x32xf32>
    %1 = vector.shape_cast %0 : vector<2x8x32xf32> to vector<16x32xf32>
    %c0_2 = arith.constant 0 : index
    %c0_3 = arith.constant 0 : index
    %2 = vector.load %arg2[%c0_2, %c0_3] : memref<32x16xf32, #tpu.memory_space<vmem>>, vector<32x16xf32>
    %cst = arith.constant dense<0.000000e+00> : vector<16x16xf32>
    %3 = tpu.matmul %1, %2, %cst {dimension_numbers = #tpu.dot_dimension_numbers<[1], [0], [0], [1], [0, 0, 1, 1], [], []>} : vector<16x32xf32>, vector<32x16xf32>, vector<16x16xf32> -> vector<16x16xf32>
    %c0_4 = arith.constant 0 : index
    %c0_5 = arith.constant 0 : index
    %4 = vector.load %arg3[%c0_4, %c0_5] : memref<1x16xf32, #tpu.memory_space<vmem>>, vector<1x16xf32>
    %5 = vector.broadcast %4 : vector<1x16xf32> to vector<16x16xf32>
    %6 = arith.addf %3, %5 : vector<16x16xf32>
    %7 = math.tanh %6 : vector<16x16xf32>
    %8 = vector.shape_cast %7 : vector<16x16xf32> to vector<2x8x16xf32>
    %c0_6 = arith.constant 0 : index
    %c0_7 = arith.constant 0 : index
    %9 = vector.load %arg4[%c0_6, %c0_7] : memref<1x16xf32, #tpu.memory_space<vmem>>, vector<1x16xf32>
    %10 = vector.shape_cast %9 : vector<1x16xf32> to vector<1x1x16xf32>
    %11 = vector.broadcast %10 : vector<1x1x16xf32> to vector<2x8x16xf32>
    %12 = arith.mulf %8, %11 : vector<2x8x16xf32>
    %cst_8 = arith.constant dense<0.000000e+00> : vector<2x8xf32>
    %13 = vector.multi_reduction <add>, %12, %cst_8 [2] : vector<2x8x16xf32> to vector<2x8xf32>
    %cst_9 = arith.constant dense<0xFF800000> : vector<2xf32>
    %14 = vector.multi_reduction <maximumf>, %13, %cst_9 [1] : vector<2x8xf32> to vector<2xf32>
    %15 = vector.shape_cast %14 : vector<2xf32> to vector<2x1xf32>
    %16 = vector.broadcast %15 : vector<2x1xf32> to vector<2x8xf32>
    %17 = arith.subf %13, %16 : vector<2x8xf32>
    %18 = math.exp %17 : vector<2x8xf32>
    %cst_10 = arith.constant dense<0.000000e+00> : vector<2xf32>
    %19 = vector.multi_reduction <add>, %18, %cst_10 [1] : vector<2x8xf32> to vector<2xf32>
    %20 = vector.shape_cast %19 : vector<2xf32> to vector<2x1xf32>
    %21 = vector.broadcast %20 : vector<2x1xf32> to vector<2x8xf32>
    %22 = arith.divf %18, %21 : vector<2x8xf32>
    %c0_11 = arith.constant 0 : index
    %c0_12 = arith.constant 0 : index
    %c0_13 = arith.constant 0 : index
    %23 = vector.load %arg1[%c0_11, %c0_12, %c0_13] : memref<2x8x32xf32, #tpu.memory_space<vmem>>, vector<2x8x32xf32>
    %24 = vector.shape_cast %22 : vector<2x8xf32> to vector<2x8x1xf32>
    %25 = vector.broadcast %24 : vector<2x8x1xf32> to vector<2x8x32xf32>
    %26 = arith.mulf %25, %23 : vector<2x8x32xf32>
    %cst_14 = arith.constant dense<0.000000e+00> : vector<2x32xf32>
    %27 = vector.multi_reduction <add>, %26, %cst_14 [1] : vector<2x8x32xf32> to vector<2x32xf32>
    %c0_15 = arith.constant 0 : index
    %c0_16 = arith.constant 0 : index
    %28 = vector.load %arg5[%c0_15, %c0_16] : memref<2x32xf32, #tpu.memory_space<vmem>>, vector<2x32xf32>
    tpu.vector_store %arg5[%c0_15, %c0_16], %27 {strides = array<i32>} : memref<2x32xf32, #tpu.memory_space<vmem>>, vector<2x32xf32>,
    return
  }
  func.func @transform_0(%arg0: i32) -> (i32, i32, i32) {
    %c0_i32 = arith.constant 0 : i32
    %c0_i32_0 = arith.constant 0 : i32
    %c0_i32_1 = arith.constant 0 : i32
    return %arg0, %c0_i32, %c0_i32_0 : i32, i32, i32
  }
  func.func @transform_1(%arg0: i32) -> (i32, i32) {
    %c0_i32 = arith.constant 0 : i32
    %c0_i32_0 = arith.constant 0 : i32
    %c0_i32_1 = arith.constant 0 : i32
    return %c0_i32, %c0_i32_0 : i32, i32
  }
  func.func @transform_2(%arg0: i32) -> (i32, i32) {
    %c0_i32 = arith.constant 0 : i32
    %c0_i32_0 = arith.constant 0 : i32
    %c0_i32_1 = arith.constant 0 : i32
    return %c0_i32, %c0_i32_0 : i32, i32
  }
  func.func @transform_3(%arg0: i32) -> (i32, i32) {
    %c0_i32 = arith.constant 0 : i32
    %c0_i32_0 = arith.constant 0 : i32
    %c0_i32_1 = arith.constant 0 : i32
    return %c0_i32, %c0_i32_0 : i32, i32
  }
  func.func @transform_4(%arg0: i32) -> (i32, i32) {
    %c0_i32 = arith.constant 0 : i32
    %c0_i32_0 = arith.constant 0 : i32
    return %arg0, %c0_i32 : i32, i32
  }
}

</mosaic_0001>

<llo_original>
// kernel: tpu_custom_call.1
$region0: #{tpu_custom_call.1}
  #allocation0 [shape = 'u32[]', space=smem, size = 0x4, offset = 0x4, fixed_abs, tag = 'smem constant byte address 0x4 - core index']
  #allocation1 [shape = 'u32[144,128]{1,0:T(1,128)}', space=vmem, size = 0x12000, scoped, tag = 'internal scratch']
  %s0 = inlined_call_operand.vmem [shape: f32[2,8,32], index: 0, kind: input, shape index: {}]
  %s1 = inlined_call_operand.vmem [shape: f32[32,16], index: 1, kind: input, shape index: {}]
  %s2 = inlined_call_operand.vmem [shape: f32[1,16], index: 2, kind: input, shape index: {}]
  %s3 = inlined_call_operand.vmem [shape: f32[1,16], index: 3, kind: input, shape index: {}]
  %s4 = inlined_call_operand.hbm [shape: f32[2,32], index: 4, kind: output, shape index: {}]
  %s5 = sld [smem:[#allocation0]]
  $region26: #{tpu_custom_call.1} parent=0
    _
  %s7 = ssub.s32 1, %s5
  %s8 = scalar_select 0, %s7, %s5
  $region1: #{tpu_custom_call.1} parent=0
    #allocation2 [shape = 'u8[1024]{0}', space=vmem, size = 0x400, scoped, tag = 'output window, operand 0, single buffered']
    #allocation3 [shape = 's32[1]{0}', space=sflag, size = 0x4, scoped, tag = 'scoped memory for tpu_custom_call.1']
    %9 = vsyncpa [#allocation3], 0
    // Predicated region
    $region2: #{tpu_custom_call.1} parent=1 // pred_check
      _
    $region3: #{tpu_custom_call.1} parent=1 // pred_check_branch
      %11 = sbr.rel (0) target = $region5
    $region4: #{tpu_custom_call.1} parent=1 // pred_region
      _
    $region5: #{tpu_custom_call.1} parent=1 // pred_fallthru
      _
    // Predicated region
    $region6: #{tpu_custom_call.1} parent=1 // pred_check
      _
    $region7: #{tpu_custom_call.1} parent=1 // pred_check_branch
      %13 = sbr.rel (0) target = $region9
    $region8: #{tpu_custom_call.1} parent=1 // pred_region
      _
    $region9: #{tpu_custom_call.1} parent=1 // pred_fallthru
      _
    // Predicated region
    $region10: #{tpu_custom_call.1} parent=1 // pred_check
      _
    $region11: #{tpu_custom_call.1} parent=1 // pred_check_branch
      %15 = sbr.rel (0) target = $region13
    $region12: #{tpu_custom_call.1} parent=1 // pred_region
      _
    $region13: #{tpu_custom_call.1} parent=1 // pred_fallthru
      _
    // Predicated region
    $region14: #{tpu_custom_call.1} parent=1 // pred_check
      _
    $region15: #{tpu_custom_call.1} parent=1 // pred_check_branch
      %17 = sbr.rel (0) target = $region17
    $region16: #{tpu_custom_call.1} parent=1 // pred_region
      _
    $region17: #{tpu_custom_call.1} parent=1 // pred_fallthru
      _
    %v18 = vld [vmem:[%s0] sm:$0xff]
    %v19 = vld [vmem:[%s0 + $0x8] sm:$0xff]
    %v20 = vld [vmem:[%s1] sm:$0xff]
    %v21 = vld [vmem:[%s1 + $0x8] sm:$0xff]
    %v22 = vld [vmem:[%s1 + $0x10] sm:$0xff]
    %v23 = vld [vmem:[%s1 + $0x18] sm:$0xff]
    %v24 = vld [vmem:[%s2] sm:$0x1]
    %v26 = vlaneseq
    %v27 = vshrl.u32 %v26, 7
    %v28 = vsub.s32 0, %v27
    %v29 = vrot.slane %v24, %v28
    %vm31 = vcmask 261120
    %v33 = vsel %vm31, %v18, 0
    %v36 = vsel %vm31, %v19, 0
    %38 = vmatprep.subr.mxu0 0.0
    %39 = vmatpush1.msra.mxu0 %v20
    %40 = vmatprep.subr.mxu0 0.0
    %41 = vmatpush1.msra.mxu0 %v21
    %42 = vmatprep.subr.mxu0 0.0
    %43 = vmatpush1.msra.mxu0 %v22
    %44 = vmatprep.subr.mxu0 0.0
    %45 = vmatpush1.msra.mxu0 %v23
    %46 = vmatprep.subr.mxu0 0.0
    %47 = vmatpush1.msra.mxu0 0.0
    %48 = vmatprep.subr.mxu0 0.0
    %49 = vmatpush1.msra.mxu0 0.0
    %50 = vmatprep.subr.mxu0 0.0
    %51 = vmatpush1.msra.mxu0 0.0
    %52 = vmatprep.subr.mxu0 0.0
    %53 = vmatpush1.msra.mxu0 0.0
    %54 = vmatprep.subr.mxu0 0.0
    %55 = vmatpush1.msra.mxu0 0.0
    %56 = vmatprep.subr.mxu0 0.0
    %57 = vmatpush1.msra.mxu0 0.0
    %58 = vmatprep.subr.mxu0 0.0
    %59 = vmatpush1.msra.mxu0 0.0
    %60 = vmatprep.subr.mxu0 0.0
    %61 = vmatpush1.msra.mxu0 0.0
    %62 = vmatprep.subr.mxu0 0.0
    %63 = vmatpush1.msra.mxu0 0.0
    %64 = vmatprep.subr.mxu0 0.0
    %65 = vmatpush1.msra.mxu0 0.0
    %66 = vmatprep.subr.mxu0 0.0
    %67 = vmatpush1.msra.mxu0 0.0
    %68 = vmatprep.subr.mxu0 0.0
    %69 = vmatpush1.msra.mxu0 0.0
    %70 = vmatprep.subr.mxu0 0.0
    %71 = vmatpush1.msra.mxu0 0.0
    %72 = vmatprep.subr.mxu0 0.0
    %73 = vmatpush1.msra.mxu0 0.0
    %74 = vmatprep.subr.mxu0 0.0
    %75 = vmatpush1.msra.mxu0 0.0
    %76 = vmatprep.subr.mxu0 0.0
    %77 = vmatpush1.msra.mxu0 0.0
    %78 = vmatprep.subr.mxu0 0.0
    %79 = vmatpush1.msra.mxu0 0.0
    %80 = vmatprep.subr.mxu0 0.0
    %81 = vmatpush1.msra.mxu0 0.0
    %82 = vmatprep.subr.mxu0 0.0
    %83 = vmatpush1.msra.mxu0 0.0
    %84 = vmatprep.subr.mxu0 0.0
    %85 = vmatpush1.msra.mxu0 0.0
    %86 = vmatprep.subr.mxu0 0.0
    %87 = vmatpush1.msra.mxu0 0.0
    %88 = vmatprep.subr.mxu0 0.0
    %89 = vmatpush1.msra.mxu0 0.0
    %90 = vmatprep.subr.mxu0 0.0
    %91 = vmatpush1.msra.mxu0 0.0
    %92 = vmatprep.subr.mxu0 0.0
    %93 = vmatpush1.msra.mxu0 0.0
    %94 = vmatprep.subr.mxu0 0.0
    %95 = vmatpush1.msra.mxu0 0.0
    %96 = vmatprep.subr.mxu0 0.0
    %97 = vmatpush1.msra.mxu0 0.0
    %98 = vmatprep.subr.mxu0 0.0
    %99 = vmatpush1.msra.mxu0 0.0
    %100 = vmatprep.subr.mxu0 0.0
    %101 = vmatpush1.msra.mxu0 0.0
    %102 = vmatprep.mubr.f32.mxu0 0.0
    %103 = vmatmul.mubr.f32.gmra.mrb[0].mxu0 %v33
    %v104 = vpop.f32.mrb[0].mxu0
    %v105 = vadd.f32 %v29, %v104
    %v106 = vpop.f32.mrb[0].mxu0
    %107 = vmatprep.mubr.f32.mxu0 0.0
    %108 = vmatmul.mubr.f32.gmra.mrb[0].mxu0 %v36
    %v109 = vpop.f32.mrb[0].mxu0
    %v110 = vadd.f32 %v29, %v109
    %v111 = vpop.f32.mrb[0].mxu0
    %112 = vdwg.mxu0
    %v113 = vtanh.pop %v105
    %v114 = vtanh.pop %v110
    %v115 = vld [vmem:[%s3] sm:$0x1]
    %v117 = vlaneseq
    %v118 = vshrl.u32 %v117, 7
    %v119 = vsub.s32 0, %v118
    %v120 = vrot.slane %v115, %v119
    %v122 = vmul.f32 %v113, %v120
    %v123 = vmul.f32 %v114, %v120
    %vm124 = vcmask 130048
    %v125 = vsel %vm124, %v122, 0.0
    %126 = vadd.xlane.f32.xlu0 %v125
    %v127 = vpop.xlane.xlu0 %126
    %v128 = vsel %vm124, %v123, 0.0
    %129 = vadd.xlane.f32.xlu0 %v128
    %v130 = vpop.xlane.xlu0 %129
    %v133 = vlaneseq
    %v134 = vand.u32 %v133, 127
    %v135 = vlaneseq
    %v136 = vshrl.u32 %v135, 7
    %v137 = vsub.s32 %v134, %v136
    %v138 = vrot.slane %v127, %v137
    %v139 = vlaneseq
    %v140 = vshrl.u32 %v139, 7
    %v141 = vsub.s32 %v134, %v140
    %v142 = vrot.slane %v130, %v141
    %vm143 = vcmask 1041409
    %v144 = vsel %vm143, %v142, %v138
    %vm146 = vcmask 58368
    %v147 = vsel %vm146, %v144, -inf
    %148 = vmax.xlane.f32.xlu0 %v147
    %v149 = vpop.xlane.xlu0 %148
    %v151 = vlaneseq
    %v152 = vshrl.u32 %v151, 7
    %v153 = vsub.s32 0, %v152
    %v154 = vrot.slane %v149, %v153
    %v155 = vlaneseq
    %v156 = vshrl.u32 %v155, 7
    %v157 = vsub.s32 1, %v156
    %v158 = vrot.slane %v149, %v157
    %v161 = vsub.f32 %v127, %v154
    %v162 = vsub.f32 %v130, %v158
    %v163 = vmul.f32 %v161, 1.442695
    %v164 = vpow.pop %v163
    %v165 = vmul.f32 %v162, 1.442695
    %v166 = vpow.pop %v165
    %169 = vset.pattern.permute.xlu0 0
    %170 = vperm.xlu0 %169, %v164
    %v171 = vpop.permute.xlu0 %170
    %172 = vset.pattern.permute.xlu0 0
    %173 = vperm.xlu0 %172, %v166
    %v174 = vpop.permute.xlu0 %173
    %v175 = vlaneseq
    %v176 = vshrl.u32 %v175, 7
    %v177 = vsub.s32 %v134, %v176
    %v178 = vrot.slane %v171, %v177
    %v179 = vlaneseq
    %v180 = vshrl.u32 %v179, 7
    %v181 = vsub.s32 %v134, %v180
    %v182 = vrot.slane %v174, %v181
    %v183 = vsel %vm143, %v182, %v178
    %v185 = vsel %vm146, %v183, 0.0
    %186 = vadd.xlane.f32.xlu0 %v185
    %v187 = vpop.xlane.xlu0 %186
    %v189 = vlaneseq
    %v190 = vshrl.u32 %v189, 7
    %v191 = vsub.s32 0, %v190
    %v192 = vrot.slane %v187, %v191
    %v193 = vlaneseq
    %v194 = vshrl.u32 %v193, 7
    %v195 = vsub.s32 1, %v194
    %v196 = vrot.slane %v187, %v195
    %v199 = vrcp.pop %v192
    %v200 = vmul.f32 %v164, %v199
    %v201 = vrcp.pop %v196
    %v202 = vmul.f32 %v166, %v201
    %204 = vset.pattern.permute.xlu0 0
    %205 = vperm.xlu0 %204, %v200
    %v206 = vpop.permute.xlu0 %205
    %209 = vset.pattern.permute.xlu0 0
    %210 = vperm.xlu0 %209, %v202
    %v211 = vpop.permute.xlu0 %210
    %v213 = vmul.f32 %v206, %v18
    %v214 = vmul.f32 %v211, %v19
    %v215 = vsel %vm31, %v213, 0.0
    %v216 = vrot.slane %v215, 4
    %v217 = vadd.f32 %v215, %v216
    %v218 = vrot.slane %v217, 2
    %v219 = vadd.f32 %v217, %v218
    %v220 = vrot.slane %v219, 1
    %v221 = vadd.f32 %v219, %v220
    %v222 = vsel %vm31, %v214, 0.0
    %v223 = vrot.slane %v222, 4
    %v224 = vadd.f32 %v222, %v223
    %v225 = vrot.slane %v224, 2
    %v226 = vadd.f32 %v224, %v225
    %v227 = vrot.slane %v226, 1
    %v228 = vadd.f32 %v226, %v227
    %v231 = vsel %vm143, %v228, %v221
    %vm233 = vcmask 254976
    %234 = vst.msk [vmem:[#allocation2] sm:$0x3] %vm233, %v231
    // Predicated region
    $region18: #{tpu_custom_call.1} parent=1 // pred_check
      _
    $region19: #{tpu_custom_call.1} parent=1 // pred_check_branch
      %236 = sbr.rel (0) target = $region21
    $region20: #{tpu_custom_call.1} parent=1 // pred_region
      %s238 = ssub.s32 32, 32
      %239 = vsyncadd [#allocation3], %s238
      %s241 = sshll.u32 [#allocation2], 4
      %s242 = int_to_ptr.vmem [resolvable:$true] %s241
      %244 = dma.vmem_to_hbm [thread:$0]  %s242, 32, %s4, [#allocation3]
    $region21: #{tpu_custom_call.1} parent=1 // pred_fallthru
      _
    // Predicated region
    $region22: #{tpu_custom_call.1} parent=1 // pred_check
      _
    $region23: #{tpu_custom_call.1} parent=1 // pred_check_branch
      %246 = sbr.rel (0) target = $region25
    $region24: #{tpu_custom_call.1} parent=1 // pred_region
      %247 = dma.done [#allocation3], 32
    $region25: #{tpu_custom_call.1} parent=1 // pred_fallthru
      _
    %248 = vsyncpa [#allocation3], 1

</llo_original>
